<compile_context>
chip_gen: v7x
topology: tpu7x:2x2x1
jax: 0.10.0
libtpu: 0.0.40
codegen_flags: <defaults>
</compile_context>

<pallas_src>
import jax
import jax.numpy as jnp
from jax.experimental import pallas as pl
from jax.experimental.pallas import tpu as pltpu


def _round_up(v, m):
    return ((v + m - 1) // m) * m


def _tile_and_pad(dim, unit, cap):
    """Pad `dim` up to `unit`, then pick the largest tile <= cap (a multiple of
    `unit`) that evenly divides the padded dim. Minimizes zero-padding waste."""
    padded = _round_up(dim, unit)
    tile = min(cap, padded)
    tile = _round_up(tile, unit)
    while padded % tile != 0:
        tile -= unit
    return tile, padded


def _linear_kernel_single_k(x_ref, w_ref, b_ref, o_ref):
    # Whole reduction fits in one tile: compute, add bias, write once.
    # x_ref: (tm, tk), w_ref: (tn, tk) in PyTorch (out, in) layout,
    # b_ref: (1, tn), o_ref: (tm, tn).
    acc = jax.lax.dot_general(
        x_ref[...], w_ref[...],
        dimension_numbers=(((1,), (1,)), ((), ())),  # contract K with K
        preferred_element_type=jnp.float32,
    )
    o_ref[...] = (acc + b_ref[...]).astype(o_ref.dtype)


def _linear_kernel_acc(x_ref, w_ref, b_ref, o_ref, acc_ref):
    # Multi-step reduction: f32 accumulator resident across the K grid axis.
    k = pl.program_id(2)

    @pl.when(k == 0)
    def _():
        acc_ref[...] = jnp.zeros_like(acc_ref)

    acc_ref[...] += jax.lax.dot_general(
        x_ref[...], w_ref[...],
        dimension_numbers=(((1,), (1,)), ((), ())),
        preferred_element_type=jnp.float32,
    )

    @pl.when(k == pl.num_programs(2) - 1)
    def _():
        # Bias added exactly once, in the f32 epilogue on the final K step.
        o_ref[...] = (acc_ref[...] + b_ref[...]).astype(o_ref.dtype)


def linear_forward(x, weight, bias, *, tm_cap=256, tn_cap=512, tk_cap=1024):
    """y = x @ weight.T + bias  (PyTorch nn.Linear forward) as a tiled Pallas matmul.

    x:      (B, num_inputs)            float32
    weight: (num_outputs, num_inputs)  float32 (PyTorch layout, NOT transposed)
    bias:   (num_outputs,)             float32
    """
    B, K = x.shape
    N, K2 = weight.shape
    assert K == K2 and bias.shape == (N,)

    tm, Bp = _tile_and_pad(B, 8, tm_cap)       # sublane unit
    tn, Np = _tile_and_pad(N, 128, tn_cap)     # lane unit (lane-dense output)
    tk, Kp = _tile_and_pad(K, 128, tk_cap)     # full MXU feed

    # Zero-pad to the (minimal) padded sizes; zeros are inert for matmul+bias.
    xp = x if (Bp == B and Kp == K) else jnp.pad(x, ((0, Bp - B), (0, Kp - K)))
    wp = weight if (Np == N and Kp == K) else jnp.pad(
        weight, ((0, Np - N), (0, Kp - K)))
    bp = (bias if Np == N else jnp.pad(bias, (0, Np - N))).reshape(1, Np)

    gm, gn, gk = Bp // tm, Np // tn, Kp // tk

    if gk == 1:
        # Fast path: no accumulator scratch, 2-D grid, direct write.
        out = pl.pallas_call(
            _linear_kernel_single_k,
            out_shape=jax.ShapeDtypeStruct((Bp, Np), x.dtype),
            grid_spec=pltpu.PrefetchScalarGridSpec(
                num_scalar_prefetch=0,
                grid=(gm, gn),
                in_specs=[
                    pl.BlockSpec((tm, tk), lambda i, j: (i, 0)),   # x
                    pl.BlockSpec((tn, tk), lambda i, j: (j, 0)),   # W (out, in)
                    pl.BlockSpec((1, tn), lambda i, j: (0, j)),    # bias
                ],
                out_specs=pl.BlockSpec((tm, tn), lambda i, j: (i, j)),
            ),
            compiler_params=pltpu.CompilerParams(
                dimension_semantics=("parallel", "parallel"),
            ),
        )(xp, wp, bp)
    else:
        out = pl.pallas_call(
            _linear_kernel_acc,
            out_shape=jax.ShapeDtypeStruct((Bp, Np), x.dtype),
            grid_spec=pltpu.PrefetchScalarGridSpec(
                num_scalar_prefetch=0,
                grid=(gm, gn, gk),
                in_specs=[
                    pl.BlockSpec((tm, tk), lambda i, j, k: (i, k)),   # x
                    pl.BlockSpec((tn, tk), lambda i, j, k: (j, k)),   # W
                    pl.BlockSpec((1, tn), lambda i, j, k: (0, j)),    # bias
                ],
                out_specs=pl.BlockSpec((tm, tn), lambda i, j, k: (i, j)),
                scratch_shapes=[pltpu.VMEM((tm, tn), jnp.float32)],
            ),
            compiler_params=pltpu.CompilerParams(
                # M, N independent -> megacore-shardable; K (reduction,
                # accumulator-resident) is last and arbitrary.
                dimension_semantics=("parallel", "parallel", "arbitrary"),
            ),
        )(xp, wp, bp)

    if (Bp, Np) != (B, N):
        out = out[:B, :N]
    return out


if __name__ == "__main__":
    key = jax.random.PRNGKey(0)

    def torch_linear_init(k, n_in, n_out):
        # PyTorch nn.Linear default init: U(-1/sqrt(fan_in), 1/sqrt(fan_in)).
        kw, kb = jax.random.split(k)
        bound = 1.0 / jnp.sqrt(jnp.float32(n_in))
        w = jax.random.uniform(kw, (n_out, n_in), jnp.float32, -bound, bound)
        b = jax.random.uniform(kb, (n_out,), jnp.float32, -bound, bound)
        return w, b

    k1, k2, k3, k4, k5, k6 = jax.random.split(key, 6)

    # Test 1: toy shapes matching the module spec (single-K fast path).
    B1, K1, N1 = 8, 32, 16
    w1, b1 = torch_linear_init(k1, K1, N1)
    x1 = jax.random.normal(k2, (B1, K1), jnp.float32)
    y1 = jax.block_until_ready(linear_forward(x1, w1, b1))
    ref1 = x1 @ w1.T + b1
    assert y1.shape == (B1, N1)
    assert jnp.allclose(y1, ref1, atol=1e-5, rtol=1e-5)

    # Test 2: non-tile-aligned shapes (minimal padding: N 272 -> 384, K 640
    # fits one tile -> single-K fast path, multi-tile over N).
    B2, K2, N2 = 96, 640, 272
    w2, b2 = torch_linear_init(k3, K2, N2)
    x2 = jax.random.normal(k4, (B2, K2), jnp.float32)
    y2 = jax.block_until_ready(linear_forward(x2, w2, b2))
    ref2 = jax.lax.dot_general(
        x2, w2, (((1,), (1,)), ((), ())),
        precision=jax.lax.Precision.HIGHEST) + b2
    assert y2.shape == (B2, N2)
    assert jnp.allclose(y2, ref2, atol=2e-4, rtol=2e-4)

    # Test 3: K > tk_cap exercises the multi-K accumulator path
    # (pl.when init at k==0, bias epilogue at the last K step).
    B3, K3, N3 = 64, 2048, 256
    w3, b3 = torch_linear_init(k5, K3, N3)
    x3 = jax.random.normal(k6, (B3, K3), jnp.float32)
    y3 = jax.block_until_ready(linear_forward(x3, w3, b3))
    ref3 = jax.lax.dot_general(
        x3, w3, (((1,), (1,)), ((), ())),
        precision=jax.lax.Precision.HIGHEST) + b3
    assert y3.shape == (B3, N3)
    assert jnp.allclose(y3, ref3, atol=5e-4, rtol=5e-4)

    print("KERNEL_OK")
</pallas_src>

<mosaic_0001>
module attributes {stable_mosaic.version = 11 : i64} {
  func.func @_linear_kernel_single_k(%arg0: i32, %arg1: i32, %arg2: memref<8x128xf32, #tpu.memory_space<vmem>>, %arg3: memref<128x128xf32, #tpu.memory_space<vmem>>, %arg4: memref<1x128xf32, #tpu.memory_space<vmem>>, %arg5: memref<8x128xf32, #tpu.memory_space<vmem>>) attributes {dimension_semantics = [#tpu.dimension_semantics<parallel>, #tpu.dimension_semantics<parallel>], iteration_bounds = array<i64: 1, 1>, scalar_prefetch = 0 : i64, scratch_operands = 0 : i64, tpu.core_type = #tpu.core_type<tc>, window_params = [{transform_indices = @transform_0, window_bounds = array<i64: 8, 128>}, {transform_indices = @transform_1, window_bounds = array<i64: 128, 128>}, {transform_indices = @transform_2, window_bounds = array<i64: 1, 128>}, {transform_indices = @transform_3, window_bounds = array<i64: 8, 128>}]} {
    %c0 = arith.constant 0 : index
    %c0_0 = arith.constant 0 : index
    %0 = vector.load %arg2[%c0, %c0_0] : memref<8x128xf32, #tpu.memory_space<vmem>>, vector<8x128xf32>
    %c0_1 = arith.constant 0 : index
    %c0_2 = arith.constant 0 : index
    %1 = vector.load %arg3[%c0_1, %c0_2] : memref<128x128xf32, #tpu.memory_space<vmem>>, vector<128x128xf32>
    %cst = arith.constant dense<0.000000e+00> : vector<8x128xf32>
    %2 = tpu.matmul %0, %1, %cst {dimension_numbers = #tpu.dot_dimension_numbers<[1], [1], [0], [0], [0, 0, 1, 0], [], []>} : vector<8x128xf32>, vector<128x128xf32>, vector<8x128xf32> -> vector<8x128xf32>
    %c0_3 = arith.constant 0 : index
    %c0_4 = arith.constant 0 : index
    %3 = vector.load %arg4[%c0_3, %c0_4] : memref<1x128xf32, #tpu.memory_space<vmem>>, vector<1x128xf32>
    %4 = vector.broadcast %3 : vector<1x128xf32> to vector<8x128xf32>
    %5 = arith.addf %2, %4 : vector<8x128xf32>
    %c0_5 = arith.constant 0 : index
    %c0_6 = arith.constant 0 : index
    %6 = vector.load %arg5[%c0_5, %c0_6] : memref<8x128xf32, #tpu.memory_space<vmem>>, vector<8x128xf32>
    tpu.vector_store %arg5[%c0_5, %c0_6], %5 {strides = array<i32>} : memref<8x128xf32, #tpu.memory_space<vmem>>, vector<8x128xf32>,
    return
  }
  func.func @transform_0(%arg0: i32, %arg1: i32) -> (i32, i32) {
    %c0_i32 = arith.constant 0 : i32
    %c0_i32_0 = arith.constant 0 : i32
    return %arg0, %c0_i32 : i32, i32
  }
  func.func @transform_1(%arg0: i32, %arg1: i32) -> (i32, i32) {
    %c0_i32 = arith.constant 0 : i32
    %c0_i32_0 = arith.constant 0 : i32
    return %arg1, %c0_i32 : i32, i32
  }
  func.func @transform_2(%arg0: i32, %arg1: i32) -> (i32, i32) {
    %c0_i32 = arith.constant 0 : i32
    %c0_i32_0 = arith.constant 0 : i32
    return %c0_i32, %arg1 : i32, i32
  }
  func.func @transform_3(%arg0: i32, %arg1: i32) -> (i32, i32) {
    %c0_i32 = arith.constant 0 : i32
    return %arg0, %arg1 : i32, i32
  }
}

</mosaic_0001>

<llo_original>
// kernel: tpu_custom_call.1
$region0: #{tpu_custom_call.1}
  #allocation0 [shape = 'u32[]', space=smem, size = 0x4, offset = 0x4, fixed_abs, tag = 'smem constant byte address 0x4 - core index']
  #allocation1 [shape = 'u32[144,128]{1,0:T(1,128)}', space=vmem, size = 0x12000, scoped, tag = 'internal scratch']
  %s0 = inlined_call_operand.hbm [shape: f32[8,128], index: 0, kind: input, shape index: {}]
  %s1 = inlined_call_operand.hbm [shape: f32[128,128], index: 1, kind: input, shape index: {}]
  %s2 = inlined_call_operand.vmem [shape: f32[1,128], index: 2, kind: input, shape index: {}]
  %s3 = inlined_call_operand.hbm [shape: f32[8,128], index: 3, kind: output, shape index: {}]
  %s4 = sld [smem:[#allocation0]]
  $region30: #{tpu_custom_call.1} parent=0
    _
  %s6 = ssub.s32 1, %s4
  %s7 = scalar_select 0, %s6, %s4
  $region1: #{tpu_custom_call.1} parent=0
    #allocation2 [shape = 'u8[4096]{0}', space=vmem, size = 0x1000, scoped, tag = 'input window, operand 0, single buffered']
    #allocation3 [shape = 's32[1]{0}', space=sflag, size = 0x4, scoped, tag = 'scoped memory for tpu_custom_call.1']
    #allocation4 [shape = 's32[1]{0}', space=sflag, size = 0x4, scoped, tag = 'scoped memory for tpu_custom_call.1']
    #allocation5 [shape = 'u8[65536]{0}', space=vmem, size = 0x10000, scoped, tag = 'input window, operand 1, single buffered']
    #allocation6 [shape = 's32[1]{0}', space=sflag, size = 0x4, scoped, tag = 'scoped memory for tpu_custom_call.1']
    #allocation7 [shape = 'u8[4096]{0}', space=vmem, size = 0x1000, scoped, tag = 'output window, operand 0, single buffered']
    %8 = vsyncpa [#allocation3], 0
    %9 = vsyncpa [#allocation6], 0
    %10 = vsyncpa [#allocation4], 0
    // Predicated region
    $region2: #{tpu_custom_call.1} parent=1 // pred_check
      _
    $region3: #{tpu_custom_call.1} parent=1 // pred_check_branch
      %12 = sbr.rel (0) target = $region5
    $region4: #{tpu_custom_call.1} parent=1 // pred_region
      %s14 = ssub.s32 128, 128
      %15 = vsyncadd [#allocation3], %s14
      %s17 = sshll.u32 [#allocation2], 4
      %s18 = int_to_ptr.vmem [resolvable:$true] %s17
      %20 = dma.hbm_to_vmem [thread:$0]  %s0, 128, %s18, [#allocation3]
    $region5: #{tpu_custom_call.1} parent=1 // pred_fallthru
      _
    // Predicated region
    $region6: #{tpu_custom_call.1} parent=1 // pred_check
      _
    $region7: #{tpu_custom_call.1} parent=1 // pred_check_branch
      %22 = sbr.rel (0) target = $region9
    $region8: #{tpu_custom_call.1} parent=1 // pred_region
      %s24 = ssub.s32 2048, 2048
      %25 = vsyncadd [#allocation6], %s24
      %s26 = sshll.u32 [#allocation5], 4
      %s27 = int_to_ptr.vmem [resolvable:$true] %s26
      %32 = dma.hbm_to_vmem [thread:$0]  %s1, 2048, %s27, [#allocation6], 128, 128, 8
    $region9: #{tpu_custom_call.1} parent=1 // pred_fallthru
      _
    // Predicated region
    $region10: #{tpu_custom_call.1} parent=1 // pred_check
      _
    $region11: #{tpu_custom_call.1} parent=1 // pred_check_branch
      %34 = sbr.rel (0) target = $region13
    $region12: #{tpu_custom_call.1} parent=1 // pred_region
      _
    $region13: #{tpu_custom_call.1} parent=1 // pred_fallthru
      _
    // Predicated region
    $region14: #{tpu_custom_call.1} parent=1 // pred_check
      _
    $region15: #{tpu_custom_call.1} parent=1 // pred_check_branch
      %36 = sbr.rel (0) target = $region17
    $region16: #{tpu_custom_call.1} parent=1 // pred_region
      %37 = dma.done [#allocation3], 128
    $region17: #{tpu_custom_call.1} parent=1 // pred_fallthru
      _
    // Predicated region
    $region18: #{tpu_custom_call.1} parent=1 // pred_check
      _
    $region19: #{tpu_custom_call.1} parent=1 // pred_check_branch
      %39 = sbr.rel (0) target = $region21
    $region20: #{tpu_custom_call.1} parent=1 // pred_region
      %40 = dma.done [#allocation6], 2048
    $region21: #{tpu_custom_call.1} parent=1 // pred_fallthru
      _
    %v41 = vld [vmem:[#allocation2] sm:$0xff]
    %v42 = vld [vmem:[#allocation5] sm:$0xff]
    %v43 = vld [vmem:[#allocation5 + $0x8] sm:$0xff]
    %v44 = vld [vmem:[#allocation5 + $0x10] sm:$0xff]
    %v45 = vld [vmem:[#allocation5 + $0x18] sm:$0xff]
    %v46 = vld [vmem:[#allocation5 + $0x20] sm:$0xff]
    %v47 = vld [vmem:[#allocation5 + $0x28] sm:$0xff]
    %v48 = vld [vmem:[#allocation5 + $0x30] sm:$0xff]
    %v49 = vld [vmem:[#allocation5 + $0x38] sm:$0xff]
    %v50 = vld [vmem:[#allocation5 + $0x40] sm:$0xff]
    %v51 = vld [vmem:[#allocation5 + $0x48] sm:$0xff]
    %v52 = vld [vmem:[#allocation5 + $0x50] sm:$0xff]
    %v53 = vld [vmem:[#allocation5 + $0x58] sm:$0xff]
    %v54 = vld [vmem:[#allocation5 + $0x60] sm:$0xff]
    %v55 = vld [vmem:[#allocation5 + $0x68] sm:$0xff]
    %v56 = vld [vmem:[#allocation5 + $0x70] sm:$0xff]
    %v57 = vld [vmem:[#allocation5 + $0x78] sm:$0xff]
    %v58 = vld [vmem:[%s2] sm:$0x1]
    %v60 = vlaneseq
    %v61 = vshrl.u32 %v60, 7
    %v62 = vsub.s32 0, %v61
    %v63 = vrot.slane %v58, %v62
    %65 = vmatprep.subr.mxu0 0.0
    %66 = vmatpush1.xpose.msra.mxu0 %v42
    %67 = vmatprep.subr.mxu0 0.0
    %68 = vmatpush1.xpose.msra.mxu0 %v43
    %69 = vmatprep.subr.mxu0 0.0
    %70 = vmatpush1.xpose.msra.mxu0 %v44
    %71 = vmatprep.subr.mxu0 0.0
    %72 = vmatpush1.xpose.msra.mxu0 %v45
    %73 = vmatprep.subr.mxu0 0.0
    %74 = vmatpush1.xpose.msra.mxu0 %v46
    %75 = vmatprep.subr.mxu0 0.0
    %76 = vmatpush1.xpose.msra.mxu0 %v47
    %77 = vmatprep.subr.mxu0 0.0
    %78 = vmatpush1.xpose.msra.mxu0 %v48
    %79 = vmatprep.subr.mxu0 0.0
    %80 = vmatpush1.xpose.msra.mxu0 %v49
    %81 = vmatprep.subr.mxu0 0.0
    %82 = vmatpush1.xpose.msra.mxu0 %v50
    %83 = vmatprep.subr.mxu0 0.0
    %84 = vmatpush1.xpose.msra.mxu0 %v51
    %85 = vmatprep.subr.mxu0 0.0
    %86 = vmatpush1.xpose.msra.mxu0 %v52
    %87 = vmatprep.subr.mxu0 0.0
    %88 = vmatpush1.xpose.msra.mxu0 %v53
    %89 = vmatprep.subr.mxu0 0.0
    %90 = vmatpush1.xpose.msra.mxu0 %v54
    %91 = vmatprep.subr.mxu0 0.0
    %92 = vmatpush1.xpose.msra.mxu0 %v55
    %93 = vmatprep.subr.mxu0 0.0
    %94 = vmatpush1.xpose.msra.mxu0 %v56
    %95 = vmatprep.subr.mxu0 0.0
    %96 = vmatpush1.xpose.msra.mxu0 %v57
    %97 = vmatprep.subr.mxu0 0.0
    %98 = vmatpush1.xpose.msra.mxu0 0.0
    %99 = vmatprep.subr.mxu0 0.0
    %100 = vmatpush1.xpose.msra.mxu0 0.0
    %101 = vmatprep.subr.mxu0 0.0
    %102 = vmatpush1.xpose.msra.mxu0 0.0
    %103 = vmatprep.subr.mxu0 0.0
    %104 = vmatpush1.xpose.msra.mxu0 0.0
    %105 = vmatprep.subr.mxu0 0.0
    %106 = vmatpush1.xpose.msra.mxu0 0.0
    %107 = vmatprep.subr.mxu0 0.0
    %108 = vmatpush1.xpose.msra.mxu0 0.0
    %109 = vmatprep.subr.mxu0 0.0
    %110 = vmatpush1.xpose.msra.mxu0 0.0
    %111 = vmatprep.subr.mxu0 0.0
    %112 = vmatpush1.xpose.msra.mxu0 0.0
    %113 = vmatprep.subr.mxu0 0.0
    %114 = vmatpush1.xpose.msra.mxu0 0.0
    %115 = vmatprep.subr.mxu0 0.0
    %116 = vmatpush1.xpose.msra.mxu0 0.0
    %117 = vmatprep.subr.mxu0 0.0
    %118 = vmatpush1.xpose.msra.mxu0 0.0
    %119 = vmatprep.subr.mxu0 0.0
    %120 = vmatpush1.xpose.msra.mxu0 0.0
    %121 = vmatprep.subr.mxu0 0.0
    %122 = vmatpush1.xpose.msra.mxu0 0.0
    %123 = vmatprep.subr.mxu0 0.0
    %124 = vmatpush1.xpose.msra.mxu0 0.0
    %125 = vmatprep.subr.mxu0 0.0
    %126 = vmatpush1.xpose.msra.mxu0 0.0
    %127 = vmatprep.subr.mxu0 0.0
    %128 = vmatpush1.xpose.msra.mxu0 0.0
    %129 = vmatprep.mubr.f32.mxu0 0.0
    %130 = vmatmul.mubr.f32.gmra.mrb[0].mxu0 %v41
    %v131 = vpop.f32.mrb[0].mxu0
    %v132 = vadd.f32 %v63, %v131
    %v133 = vpop.f32.mrb[0].mxu0
    %134 = vdwg.mxu0
    %135 = vst [vmem:[#allocation7] sm:$0xff] %v132
    // Predicated region
    $region22: #{tpu_custom_call.1} parent=1 // pred_check
      _
    $region23: #{tpu_custom_call.1} parent=1 // pred_check_branch
      %137 = sbr.rel (0) target = $region25
    $region24: #{tpu_custom_call.1} parent=1 // pred_region
      %s139 = ssub.s32 128, 128
      %140 = vsyncadd [#allocation4], %s139
      %s142 = sshll.u32 [#allocation7], 4
      %s143 = int_to_ptr.vmem [resolvable:$true] %s142
      %145 = dma.vmem_to_hbm [thread:$0]  %s143, 128, %s3, [#allocation4]
    $region25: #{tpu_custom_call.1} parent=1 // pred_fallthru
      _
    // Predicated region
    $region26: #{tpu_custom_call.1} parent=1 // pred_check
      _
    $region27: #{tpu_custom_call.1} parent=1 // pred_check_branch
      %147 = sbr.rel (0) target = $region29
    $region28: #{tpu_custom_call.1} parent=1 // pred_region
      %148 = dma.done [#allocation4], 128
    $region29: #{tpu_custom_call.1} parent=1 // pred_fallthru
      _
    %149 = vsyncpa [#allocation3], 1
    %150 = vsyncpa [#allocation6], 1
    %151 = vsyncpa [#allocation4], 1

</llo_original>
